<compile_context>
chip_gen: v6e
topology: v6e:2x2x1
jax: 0.10.0
libtpu: 0.0.40
codegen_flags: <defaults>
</compile_context>

<pallas_src>
import functools
from typing import NamedTuple

import jax
import jax.numpy as jnp
from jax.experimental import pallas as pl
from jax.experimental.pallas import tpu as pltpu


LANE = 128          # final logits lane-padded to this many columns
BF16_SUBLANE = 16   # bf16 sublane tile: packed-weight segments start on multiples


class Meta(NamedTuple):
    """Static layout info (hashable -> usable as a jit static arg)."""
    h4: int            # width of the 4th hidden layer (64)
    num_classes: int
    r_enc: int         # row offsets of segments inside the packed weight buffer
    r_w4: int
    r_w5: int


# --------------------------------------------------------------------------
# Fused kernel: encoder stand-in (last timestep only) + 5-layer MLP head.
#   h  = tanh(mel_last @ W_enc + b_enc)                        (B, D)
#   x  = relu(x @ Wi + bi)  for i = 1..4
#   y  = x @ W5p + b5p      (W5/b5 zero-padded to 128 lanes)   (B, 128)
# Biases live in one packed (6, 512) f32 buffer (one row each), the three
# small weights in one packed (rows, 128) bf16 buffer.
# --------------------------------------------------------------------------
def fused_kernel(mel_ref, bias_ref, wpack_ref, w1_ref, w2_ref, w3_ref, out_ref,
                 *, h4, r_enc, r_w4, r_w5):
    n_mels = mel_ref.shape[1]
    d_model = w1_ref.shape[0]
    h1 = w1_ref.shape[1]
    h2 = w2_ref.shape[1]
    h3 = w3_ref.shape[1]
    c_pad = out_ref.shape[1]

    # Static sub-window loads from the packed small-weight buffer (bf16).
    we = wpack_ref[r_enc:r_enc + n_mels, :d_model]     # (n_mels, d_model)
    w4 = wpack_ref[r_w4:r_w4 + h3, :h4]                # (h3, h4)
    w5 = wpack_ref[r_w5:r_w5 + h4, :c_pad]             # (h4, 128)

    # Encoder stand-in on the last timestep only (bf16 operands, f32 acc).
    h = jnp.tanh(
        jnp.dot(mel_ref[...].astype(jnp.bfloat16), we,
                preferred_element_type=jnp.float32)
        + bias_ref[0:1, :d_model])                                   # (B, D)

    # Classifier MLP — f32 accumulate / bias / ReLU, bf16 matmul operands.
    x = jnp.maximum(
        jnp.dot(h.astype(jnp.bfloat16), w1_ref[...],
                preferred_element_type=jnp.float32)
        + bias_ref[1:2, :h1], 0.0)                                   # (B, 512)
    x = jnp.maximum(
        jnp.dot(x.astype(jnp.bfloat16), w2_ref[...],
                preferred_element_type=jnp.float32)
        + bias_ref[2:3, :h2], 0.0)                                   # (B, 256)
    x = jnp.maximum(
        jnp.dot(x.astype(jnp.bfloat16), w3_ref[...],
                preferred_element_type=jnp.float32)
        + bias_ref[3:4, :h3], 0.0)                                   # (B, 128)
    x = jnp.maximum(
        jnp.dot(x.astype(jnp.bfloat16), w4,
                preferred_element_type=jnp.float32)
        + bias_ref[4:5, :h4], 0.0)                                   # (B, 64)

    # Lane-dense (B, 128) store; true logits live in the first C columns.
    out_ref[...] = (
        jnp.dot(x.astype(jnp.bfloat16), w5,
                preferred_element_type=jnp.float32)
        + bias_ref[5:6, :c_pad])


# --------------------------------------------------------------------------
# One-time parameter preparation (NOT in the per-call hot path).
# --------------------------------------------------------------------------
def prepare_params(params):
    n_mels, d_model = params["w_enc"].shape
    h1 = params["w1"].shape[1]
    h2 = params["w2"].shape[1]
    h3 = params["w3"].shape[1]
    h4 = params["w4"].shape[1]
    num_classes = params["w5"].shape[1]
    c_pad = LANE

    # Lane-dense final layer: pad output columns to 128 once, here.
    w5p = jnp.pad(params["w5"], ((0, 0), (0, c_pad - num_classes)))
    b5p = jnp.pad(params["b5"], ((0, 0), (0, c_pad - num_classes)))

    # Pack the six bias vectors into one (6, bw) f32 buffer -> single DMA.
    bw = max(d_model, h1, h2, h3, h4, c_pad)
    def _brow(b):
        return jnp.pad(b, ((0, 0), (0, bw - b.shape[1])))
    bias_pack = jnp.concatenate(
        [_brow(params["b_enc"]), _brow(params["b1"]), _brow(params["b2"]),
         _brow(params["b3"]), _brow(params["b4"]), _brow(b5p)],
        axis=0).astype(jnp.float32)                                  # (6, 512)

    # Pack the three small weights into one bf16 buffer -> single DMA.
    pw = max(d_model, h4, c_pad)
    def _wseg(w):
        rows = -(-w.shape[0] // BF16_SUBLANE) * BF16_SUBLANE
        return jnp.pad(w, ((0, rows - w.shape[0]), (0, pw - w.shape[1]))), rows
    enc_seg, enc_rows = _wseg(params["w_enc"])
    w4_seg, w4_rows = _wseg(params["w4"])
    w5_seg, _ = _wseg(w5p)
    wpack = jnp.concatenate([enc_seg, w4_seg, w5_seg],
                            axis=0).astype(jnp.bfloat16)             # (224, 128)

    prepped = {
        "bias": bias_pack,
        "wpack": wpack,
        "w1": params["w1"].astype(jnp.bfloat16),
        "w2": params["w2"].astype(jnp.bfloat16),
        "w3": params["w3"].astype(jnp.bfloat16),
    }
    meta = Meta(h4=h4, num_classes=num_classes,
                r_enc=0, r_w4=enc_rows, r_w5=enc_rows + w4_rows)
    return prepped, meta


# --------------------------------------------------------------------------
# Forward pass (single fused pallas_call, everything resident in VMEM).
# --------------------------------------------------------------------------
@functools.partial(jax.jit, static_argnames=("meta",))
def forward(mel, prepped, meta):
    B, T, _ = mel.shape

    # encoder(...).last_hidden_state[:, -1, :] only needs the last timestep;
    # (the stand-in encoder has no temporal mixing).
    mel_last = mel[:, T - 1, :]                                      # (B, N)

    kernel = functools.partial(fused_kernel, h4=meta.h4,
                               r_enc=meta.r_enc, r_w4=meta.r_w4,
                               r_w5=meta.r_w5)

    out_padded = pl.pallas_call(
        kernel,
        out_shape=jax.ShapeDtypeStruct((B, LANE), jnp.float32),
        in_specs=[pl.BlockSpec(memory_space=pltpu.MemorySpace.VMEM)] * 6,
        out_specs=pl.BlockSpec(memory_space=pltpu.MemorySpace.VMEM),
    )(mel_last, prepped["bias"], prepped["wpack"],
      prepped["w1"], prepped["w2"], prepped["w3"])

    return out_padded[:, :meta.num_classes]


def init_params(key, n_mels, d_model, num_classes):
    """Deterministic synthetic parameters (shapes mirror the nn.Module)."""
    dims = [d_model, 512, 256, 128, 64, num_classes]
    keys = jax.random.split(key, 2 + 2 * (len(dims) - 1))
    params = {
        "w_enc": jax.random.normal(keys[0], (n_mels, d_model), jnp.float32)
                 / jnp.sqrt(n_mels).astype(jnp.float32),
        "b_enc": jax.random.normal(keys[1], (1, d_model), jnp.float32) * 0.01,
    }
    for i in range(len(dims) - 1):
        fan_in, fan_out = dims[i], dims[i + 1]
        params[f"w{i+1}"] = (jax.random.normal(keys[2 + 2 * i],
                                               (fan_in, fan_out), jnp.float32)
                             / jnp.sqrt(fan_in).astype(jnp.float32))
        params[f"b{i+1}"] = (jax.random.normal(keys[3 + 2 * i],
                                               (1, fan_out), jnp.float32) * 0.01)
    return params


if __name__ == "__main__":
    B, T, N_MELS = 2, 8, 32        # small synthetic mel spectrogram
    D_MODEL = 64                   # encoder.config.d_model (synthetic)
    NUM_CLASSES = 1

    key = jax.random.PRNGKey(0)
    k_x, k_p = jax.random.split(key)
    mel = jax.random.normal(k_x, (B, T, N_MELS), jnp.float32)
    params = init_params(k_p, N_MELS, D_MODEL, NUM_CLASSES)

    prepped, meta = prepare_params(params)

    logits = forward(mel, prepped, meta=meta)
    jax.block_until_ready(logits)

    # pure-JAX f32 reference: full-T encoder stand-in, then [:, -1, :] as in
    # the original module forward.  The kernel uses bf16 matmul operands with
    # f32 accumulation, so the comparison tolerance is loosened accordingly.
    h = jnp.tanh(jnp.einsum("btn,nd->btd", mel, params["w_enc"])
                 + params["b_enc"][None])[:, -1, :]
    x = h
    for i in range(1, 5):
        x = jnp.maximum(x @ params[f"w{i}"] + params[f"b{i}"], 0.0)
    ref = x @ params["w5"] + params["b5"]

    assert logits.shape == (B, NUM_CLASSES)
    assert jnp.allclose(logits, ref, atol=5e-2, rtol=5e-2), (logits, ref)

    print("KERNEL_OK")
</pallas_src>

<mosaic_0001>
module attributes {stable_mosaic.version = 11 : i64} {
  func.func @fused_kernel(%arg0: memref<2x32xf32, #tpu.memory_space<vmem>>, %arg1: memref<6x512xf32, #tpu.memory_space<vmem>>, %arg2: memref<224x128xbf16, #tpu.memory_space<vmem>>, %arg3: memref<64x512xbf16, #tpu.memory_space<vmem>>, %arg4: memref<512x256xbf16, #tpu.memory_space<vmem>>, %arg5: memref<256x128xbf16, #tpu.memory_space<vmem>>, %arg6: memref<2x128xf32, #tpu.memory_space<vmem>>) attributes {dimension_semantics = [], scalar_prefetch = 0 : i64, scratch_operands = 0 : i64, tpu.core_type = #tpu.core_type<tc>} {
    %c0 = arith.constant 0 : index
    %c0_0 = arith.constant 0 : index
    %0 = vector.load %arg2[%c0, %c0_0] : memref<224x128xbf16, #tpu.memory_space<vmem>>, vector<32x64xbf16>
    %c32 = arith.constant 32 : index
    %c0_1 = arith.constant 0 : index
    %1 = vector.load %arg2[%c32, %c0_1] : memref<224x128xbf16, #tpu.memory_space<vmem>>, vector<128x64xbf16>
    %c160 = arith.constant 160 : index
    %c0_2 = arith.constant 0 : index
    %2 = vector.load %arg2[%c160, %c0_2] : memref<224x128xbf16, #tpu.memory_space<vmem>>, vector<64x128xbf16>
    %c0_3 = arith.constant 0 : index
    %c0_4 = arith.constant 0 : index
    %3 = vector.load %arg0[%c0_3, %c0_4] : memref<2x32xf32, #tpu.memory_space<vmem>>, vector<2x32xf32>
    %4 = arith.truncf %3 : vector<2x32xf32> to vector<2x32xbf16>
    %cst = arith.constant dense<0.000000e+00> : vector<2x64xf32>
    %5 = tpu.matmul %4, %0, %cst {dimension_numbers = #tpu.dot_dimension_numbers<[1], [0], [0], [1], [0, 0, 1, 1], [], []>} : vector<2x32xbf16>, vector<32x64xbf16>, vector<2x64xf32> -> vector<2x64xf32>
    %c0_5 = arith.constant 0 : index
    %c0_6 = arith.constant 0 : index
    %6 = vector.load %arg1[%c0_5, %c0_6] : memref<6x512xf32, #tpu.memory_space<vmem>>, vector<1x64xf32>
    %7 = vector.broadcast %6 : vector<1x64xf32> to vector<2x64xf32>
    %8 = arith.addf %5, %7 : vector<2x64xf32>
    %9 = math.tanh %8 : vector<2x64xf32>
    %10 = arith.truncf %9 : vector<2x64xf32> to vector<2x64xbf16>
    %c0_7 = arith.constant 0 : index
    %c0_8 = arith.constant 0 : index
    %11 = vector.load %arg3[%c0_7, %c0_8] : memref<64x512xbf16, #tpu.memory_space<vmem>>, vector<64x512xbf16>
    %cst_9 = arith.constant dense<0.000000e+00> : vector<2x512xf32>
    %12 = tpu.matmul %10, %11, %cst_9 {dimension_numbers = #tpu.dot_dimension_numbers<[1], [0], [0], [1], [0, 0, 1, 1], [], []>} : vector<2x64xbf16>, vector<64x512xbf16>, vector<2x512xf32> -> vector<2x512xf32>
    %c1 = arith.constant 1 : index
    %c0_10 = arith.constant 0 : index
    %13 = vector.load %arg1[%c1, %c0_10] : memref<6x512xf32, #tpu.memory_space<vmem>>, vector<1x512xf32>
    %14 = vector.broadcast %13 : vector<1x512xf32> to vector<2x512xf32>
    %15 = arith.addf %12, %14 : vector<2x512xf32>
    %cst_11 = arith.constant 0.000000e+00 : f32
    %16 = vector.broadcast %cst_11 : f32 to vector<2x512xf32>
    %17 = arith.maximumf %15, %16 : vector<2x512xf32>
    %18 = arith.truncf %17 : vector<2x512xf32> to vector<2x512xbf16>
    %c0_12 = arith.constant 0 : index
    %c0_13 = arith.constant 0 : index
    %19 = vector.load %arg4[%c0_12, %c0_13] : memref<512x256xbf16, #tpu.memory_space<vmem>>, vector<512x256xbf16>
    %cst_14 = arith.constant dense<0.000000e+00> : vector<2x256xf32>
    %20 = tpu.matmul %18, %19, %cst_14 {dimension_numbers = #tpu.dot_dimension_numbers<[1], [0], [0], [1], [0, 0, 1, 1], [], []>} : vector<2x512xbf16>, vector<512x256xbf16>, vector<2x256xf32> -> vector<2x256xf32>
    %c2 = arith.constant 2 : index
    %c0_15 = arith.constant 0 : index
    %21 = vector.load %arg1[%c2, %c0_15] : memref<6x512xf32, #tpu.memory_space<vmem>>, vector<1x256xf32>
    %22 = vector.broadcast %21 : vector<1x256xf32> to vector<2x256xf32>
    %23 = arith.addf %20, %22 : vector<2x256xf32>
    %cst_16 = arith.constant 0.000000e+00 : f32
    %24 = vector.broadcast %cst_16 : f32 to vector<2x256xf32>
    %25 = arith.maximumf %23, %24 : vector<2x256xf32>
    %26 = arith.truncf %25 : vector<2x256xf32> to vector<2x256xbf16>
    %c0_17 = arith.constant 0 : index
    %c0_18 = arith.constant 0 : index
    %27 = vector.load %arg5[%c0_17, %c0_18] : memref<256x128xbf16, #tpu.memory_space<vmem>>, vector<256x128xbf16>
    %cst_19 = arith.constant dense<0.000000e+00> : vector<2x128xf32>
    %28 = tpu.matmul %26, %27, %cst_19 {dimension_numbers = #tpu.dot_dimension_numbers<[1], [0], [0], [1], [0, 0, 1, 1], [], []>} : vector<2x256xbf16>, vector<256x128xbf16>, vector<2x128xf32> -> vector<2x128xf32>
    %c3 = arith.constant 3 : index
    %c0_20 = arith.constant 0 : index
    %29 = vector.load %arg1[%c3, %c0_20] : memref<6x512xf32, #tpu.memory_space<vmem>>, vector<1x128xf32>
    %30 = vector.broadcast %29 : vector<1x128xf32> to vector<2x128xf32>
    %31 = arith.addf %28, %30 : vector<2x128xf32>
    %cst_21 = arith.constant 0.000000e+00 : f32
    %32 = vector.broadcast %cst_21 : f32 to vector<2x128xf32>
    %33 = arith.maximumf %31, %32 : vector<2x128xf32>
    %34 = arith.truncf %33 : vector<2x128xf32> to vector<2x128xbf16>
    %cst_22 = arith.constant dense<0.000000e+00> : vector<2x64xf32>
    %35 = tpu.matmul %34, %1, %cst_22 {dimension_numbers = #tpu.dot_dimension_numbers<[1], [0], [0], [1], [0, 0, 1, 1], [], []>} : vector<2x128xbf16>, vector<128x64xbf16>, vector<2x64xf32> -> vector<2x64xf32>
    %c4 = arith.constant 4 : index
    %c0_23 = arith.constant 0 : index
    %36 = vector.load %arg1[%c4, %c0_23] : memref<6x512xf32, #tpu.memory_space<vmem>>, vector<1x64xf32>
    %37 = vector.broadcast %36 : vector<1x64xf32> to vector<2x64xf32>
    %38 = arith.addf %35, %37 : vector<2x64xf32>
    %cst_24 = arith.constant 0.000000e+00 : f32
    %39 = vector.broadcast %cst_24 : f32 to vector<2x64xf32>
    %40 = arith.maximumf %38, %39 : vector<2x64xf32>
    %41 = arith.truncf %40 : vector<2x64xf32> to vector<2x64xbf16>
    %cst_25 = arith.constant dense<0.000000e+00> : vector<2x128xf32>
    %42 = tpu.matmul %41, %2, %cst_25 {dimension_numbers = #tpu.dot_dimension_numbers<[1], [0], [0], [1], [0, 0, 1, 1], [], []>} : vector<2x64xbf16>, vector<64x128xbf16>, vector<2x128xf32> -> vector<2x128xf32>
    %c5 = arith.constant 5 : index
    %c0_26 = arith.constant 0 : index
    %43 = vector.load %arg1[%c5, %c0_26] : memref<6x512xf32, #tpu.memory_space<vmem>>, vector<1x128xf32>
    %44 = vector.broadcast %43 : vector<1x128xf32> to vector<2x128xf32>
    %45 = arith.addf %42, %44 : vector<2x128xf32>
    %c0_27 = arith.constant 0 : index
    %c0_28 = arith.constant 0 : index
    %46 = vector.load %arg6[%c0_27, %c0_28] : memref<2x128xf32, #tpu.memory_space<vmem>>, vector<2x128xf32>
    tpu.vector_store %arg6[%c0_27, %c0_28], %45 {strides = array<i32>} : memref<2x128xf32, #tpu.memory_space<vmem>>, vector<2x128xf32>,
    return
  }
}

</mosaic_0001>

<llo_original>
// kernel: forward.1
$region0: #{forward.1}
  #allocation0 [shape = 'u32[]', space=smem, size = 0x4, offset = 0x4, fixed_abs, tag = 'smem constant byte address 0x4 - core index']
  #allocation1 [shape = 'u32[144,128]{1,0:T(1,128)}', space=vmem, size = 0x12000, scoped, tag = 'internal scratch']
  %s0 = inlined_call_operand.vmem [shape: f32[2,32], index: 0, kind: input, shape index: {}]
  %s1 = inlined_call_operand.hbm [shape: f32[6,512], index: 1, kind: input, shape index: {}]
  %s2 = inlined_call_operand.hbm [shape: bf16[224,128], index: 2, kind: input, shape index: {}]
  %s3 = inlined_call_operand.hbm [shape: bf16[64,512], index: 3, kind: input, shape index: {}]
  %s4 = inlined_call_operand.hbm [shape: bf16[512,256], index: 4, kind: input, shape index: {}]
  %s5 = inlined_call_operand.hbm [shape: bf16[256,128], index: 5, kind: input, shape index: {}]
  %s6 = inlined_call_operand.vmem [shape: f32[2,128], index: 6, kind: output, shape index: {}]
  %s7 = sld [smem:[#allocation0]]
  $region54: #{forward.1} parent=0
    _
  %s9 = ssub.s32 1, %s7
  %s10 = scalar_select 0, %s9, %s7
  $region1: #{forward.1} parent=0
    #allocation2 [shape = 'u8[16384]{0}', space=vmem, size = 0x4000, scoped, tag = 'input window, operand 1, single buffered']
    #allocation3 [shape = 's32[1]{0}', space=sflag, size = 0x4, scoped, tag = 'scoped memory for forward.1']
    #allocation4 [shape = 'u8[57344]{0}', space=vmem, size = 0xe000, scoped, tag = 'input window, operand 2, single buffered']
    #allocation5 [shape = 's32[1]{0}', space=sflag, size = 0x4, scoped, tag = 'scoped memory for forward.1']
    #allocation6 [shape = 'u8[65536]{0}', space=vmem, size = 0x10000, scoped, tag = 'input window, operand 3, single buffered']
    #allocation7 [shape = 'u8[262144]{0}', space=vmem, size = 0x40000, scoped, tag = 'input window, operand 4, single buffered']
    #allocation8 [shape = 's32[1]{0}', space=sflag, size = 0x4, scoped, tag = 'scoped memory for forward.1']
    #allocation9 [shape = 'u8[65536]{0}', space=vmem, size = 0x10000, scoped, tag = 'input window, operand 5, single buffered']
    %11 = vsyncpa [#allocation3], 0
    %12 = vsyncpa [#allocation5], 0
    %13 = vsyncpa [#allocation8], 0
    // Predicated region
    $region2: #{forward.1} parent=1 // pred_check
      _
    $region3: #{forward.1} parent=1 // pred_check_branch
      %15 = sbr.rel (0) target = $region5
    $region4: #{forward.1} parent=1 // pred_region
      _
    $region5: #{forward.1} parent=1 // pred_fallthru
      _
    // Predicated region
    $region6: #{forward.1} parent=1 // pred_check
      _
    $region7: #{forward.1} parent=1 // pred_check_branch
      %17 = sbr.rel (0) target = $region9
    $region8: #{forward.1} parent=1 // pred_region
      %s19 = ssub.s32 512, 512
      %20 = vsyncadd [#allocation3], %s19
      %s22 = sshll.u32 [#allocation2], 4
      %s23 = int_to_ptr.vmem [resolvable:$true] %s22
      %25 = dma.hbm_to_vmem [thread:$0]  %s1, 512, %s23, [#allocation3]
    $region9: #{forward.1} parent=1 // pred_fallthru
      _
    // Predicated region
    $region10: #{forward.1} parent=1 // pred_check
      _
    $region11: #{forward.1} parent=1 // pred_check_branch
      %27 = sbr.rel (0) target = $region13
    $region12: #{forward.1} parent=1 // pred_region
      %s29 = ssub.s32 1792, 1792
      %30 = vsyncadd [#allocation5], %s29
      %s31 = sshll.u32 [#allocation4], 4
      %s32 = int_to_ptr.vmem [resolvable:$true] %s31
      %37 = dma.hbm_to_vmem [thread:$0]  %s2, 1792, %s32, [#allocation5], 64, 64, 4
    $region13: #{forward.1} parent=1 // pred_fallthru
      _
    // Predicated region
    $region14: #{forward.1} parent=1 // pred_check
      _
    $region15: #{forward.1} parent=1 // pred_check_branch
      %39 = sbr.rel (0) target = $region17
    $region16: #{forward.1} parent=1 // pred_region
      %s41 = ssub.s32 2048, 2048
      %42 = vsyncadd [#allocation5], %s41
      %s43 = sshll.u32 [#allocation6], 4
      %s44 = int_to_ptr.vmem [resolvable:$true] %s43
      %49 = dma.hbm_to_vmem [thread:$0]  %s3, 2048, %s44, [#allocation5], 256, 256, 16
    $region17: #{forward.1} parent=1 // pred_fallthru
      _
    // Predicated region
    $region18: #{forward.1} parent=1 // pred_check
      _
    $region19: #{forward.1} parent=1 // pred_check_branch
      %51 = sbr.rel (0) target = $region21
    $region20: #{forward.1} parent=1 // pred_region
      %s53 = ssub.s32 8192, 8192
      %54 = vsyncadd [#allocation8], %s53
      %s55 = sshll.u32 [#allocation7], 4
      %s56 = int_to_ptr.vmem [resolvable:$true] %s55
      %61 = dma.hbm_to_vmem [thread:$0]  %s4, 8192, %s56, [#allocation8], 128, 128, 8
    $region21: #{forward.1} parent=1 // pred_fallthru
      _
    // Predicated region
    $region22: #{forward.1} parent=1 // pred_check
      _
    $region23: #{forward.1} parent=1 // pred_check_branch
      %63 = sbr.rel (0) target = $region25
    $region24: #{forward.1} parent=1 // pred_region
      %s65 = ssub.s32 2048, 2048
      %66 = vsyncadd [#allocation8], %s65
      %s67 = sshll.u32 [#allocation9], 4
      %s68 = int_to_ptr.vmem [resolvable:$true] %s67
      %73 = dma.hbm_to_vmem [thread:$0]  %s5, 2048, %s68, [#allocation8], 64, 64, 4
    $region25: #{forward.1} parent=1 // pred_fallthru
      _
    // Predicated region
    $region26: #{forward.1} parent=1 // pred_check
      _
    $region27: #{forward.1} parent=1 // pred_check_branch
      %75 = sbr.rel (0) target = $region29
    $region28: #{forward.1} parent=1 // pred_region
      %76 = dma.done [#allocation3], 512
    $region29: #{forward.1} parent=1 // pred_fallthru
      _
    // Predicated region
    $region30: #{forward.1} parent=1 // pred_check
      _
    $region31: #{forward.1} parent=1 // pred_check_branch
      %78 = sbr.rel (0) target = $region33
    $region32: #{forward.1} parent=1 // pred_region
      %79 = dma.done [#allocation5], 1792
    $region33: #{forward.1} parent=1 // pred_fallthru
      _
    // Predicated region
    $region34: #{forward.1} parent=1 // pred_check
      _
    $region35: #{forward.1} parent=1 // pred_check_branch
      %81 = sbr.rel (0) target = $region37
    $region36: #{forward.1} parent=1 // pred_region
      %82 = dma.done [#allocation5], 2048
    $region37: #{forward.1} parent=1 // pred_fallthru
      _
    // Predicated region
    $region38: #{forward.1} parent=1 // pred_check
      _
    $region39: #{forward.1} parent=1 // pred_check_branch
      %84 = sbr.rel (0) target = $region41
    $region40: #{forward.1} parent=1 // pred_region
      %85 = dma.done [#allocation8], 8192
    $region41: #{forward.1} parent=1 // pred_fallthru
      _
    // Predicated region
    $region42: #{forward.1} parent=1 // pred_check
      _
    $region43: #{forward.1} parent=1 // pred_check_branch
      %87 = sbr.rel (0) target = $region45
    $region44: #{forward.1} parent=1 // pred_region
      %88 = dma.done [#allocation8], 2048
    $region45: #{forward.1} parent=1 // pred_fallthru
      _
    %v90 = vld [vmem:[#allocation4] sm:$0xf]
    %v91 = vld [vmem:[#allocation4 + $0x4] sm:$0xf]
    %v92 = vld [vmem:[#allocation4 + $0x8] sm:$0xf]
    %v93 = vld [vmem:[#allocation4 + $0xc] sm:$0xf]
    %v94 = vld [vmem:[#allocation4 + $0x10] sm:$0xf]
    %v95 = vld [vmem:[#allocation4 + $0x14] sm:$0xf]
    %v96 = vld [vmem:[#allocation4 + $0x18] sm:$0xf]
    %v97 = vld [vmem:[#allocation4 + $0x1c] sm:$0xf]
    %v98 = vld [vmem:[#allocation4 + $0x20] sm:$0xf]
    %v99 = vld [vmem:[#allocation4 + $0x24] sm:$0xf]
    %v100 = vld [vmem:[#allocation4 + $0x28] sm:$0xf]
    %v101 = vld [vmem:[#allocation4 + $0x2c] sm:$0xf]
    %v102 = vld [vmem:[#allocation4 + $0x30] sm:$0xf]
    %v103 = vld [vmem:[#allocation4 + $0x34] sm:$0xf]
    %v104 = vld [vmem:[#allocation4 + $0x38] sm:$0xf]
    %v105 = vld [vmem:[#allocation4 + $0x3c] sm:$0xf]
    %v106 = vld [vmem:[#allocation4 + $0x40] sm:$0xf]
    %v107 = vld [vmem:[#allocation4 + $0x44] sm:$0xf]
    %v108 = vld [vmem:[#allocation4 + $0x48] sm:$0xf]
    %v109 = vld [vmem:[#allocation4 + $0x4c] sm:$0xf]
    %v110 = vld [vmem:[#allocation4 + $0x50] sm:$0xf]
    %v111 = vld [vmem:[#allocation4 + $0x54] sm:$0xf]
    %v112 = vld [vmem:[#allocation4 + $0x58] sm:$0xf]
    %v113 = vld [vmem:[#allocation4 + $0x5c] sm:$0xf]
    %v114 = vld [vmem:[#allocation4 + $0x60] sm:$0xf]
    %v115 = vld [vmem:[#allocation4 + $0x64] sm:$0xf]
    %v116 = vld [vmem:[#allocation4 + $0x68] sm:$0xf]
    %v117 = vld [vmem:[#allocation4 + $0x6c] sm:$0xf]
    %v118 = vld [vmem:[%s0] sm:$0x3]
    %v119 = vpack.c.bf16 %v118, %v118
    %v120 = vld [vmem:[#allocation2] ss:$0 sm:$0xff]
    %v125 = vunpack.c.l.b16 %v90
    %v126 = vunpack.c.l.b16 %v91
    %v127 = vunpack.c.l.b16 %v92
    %v128 = vunpack.c.l.b16 %v93
    %v129 = vpack.c.b16 %v126, %v125
    %v130 = vpack.c.b16 %v128, %v127
    %vm133 = vcmask 261120
    %v135 = vsel %vm133, %v119, 0
    %137 = vmatprep.subr.bf16.mxu0 0
    %138 = vmatpush1.bf16.msra.mxu0 0
    %139 = vmatprep.subr.bf16.mxu0 0
    %140 = vmatpush1.bf16.msra.mxu0 0
    %141 = vmatprep.subr.bf16.mxu0 0
    %142 = vmatpush1.bf16.msra.mxu0 0
    %143 = vmatprep.subr.bf16.mxu0 0
    %144 = vmatpush1.bf16.msra.mxu0 0
    %145 = vmatprep.subr.bf16.mxu0 0
    %146 = vmatpush1.bf16.msra.mxu0 0
    %147 = vmatprep.subr.bf16.mxu0 0
    %148 = vmatpush1.bf16.msra.mxu0 0
    %149 = vmatprep.subr.bf16.mxu0 0
    %150 = vmatpush1.bf16.msra.mxu0 %v130
    %151 = vmatprep.subr.bf16.mxu0 0
    %152 = vmatpush1.bf16.msra.mxu0 %v129
    %153 = vmatprep.subr.bf16.mxu0 0
    %154 = vmatpush2.bf16.msra.mxu0 0
    %155 = vmatprep.subr.bf16.mxu0 0
    %156 = vmatpush2.bf16.msra.mxu0 0
    %157 = vmatprep.subr.bf16.mxu0 0
    %158 = vmatpush2.bf16.msra.mxu0 0
    %159 = vmatprep.subr.bf16.mxu0 0
    %160 = vmatpush2.bf16.msra.mxu0 0
    %161 = vmatprep.subr.bf16.mxu0 0
    %162 = vmatpush2.bf16.msra.mxu0 0
    %163 = vmatprep.subr.bf16.mxu0 0
    %164 = vmatpush2.bf16.msra.mxu0 0
    %165 = vmatprep.subr.bf16.mxu0 0
    %166 = vmatpush2.bf16.msra.mxu0 0
    %167 = vmatprep.subr.bf16.mxu0 0
    %168 = vmatpush2.bf16.msra.mxu0 0
    %169 = vmatprep.mubr.bf16.mxu0 0
    %170 = vmatmul.mubr.bf16.gmra.mxu0 %v135
    %v171 = vpop.f32.mrf.mxu0
    %v172 = vadd.f32 %v120, %v171
    %v173 = vpop.f32.mrf.mxu0
    %v174 = vpop.f32.mrf.mxu0
    %v175 = vpop.f32.mrf.mxu0
    %176 = vdwg.mxu0
    %v177 = vtanh.pop %v172
    %v178 = vpack.c.bf16 %v177, %v177
    %v179 = vld [vmem:[#allocation6] sm:$0xff]
    %v180 = vld [vmem:[#allocation6 + $0x8] sm:$0xff]
    %v181 = vld [vmem:[#allocation6 + $0x10] sm:$0xff]
    %v182 = vld [vmem:[#allocation6 + $0x18] sm:$0xff]
    %v183 = vld [vmem:[#allocation6 + $0x20] sm:$0xff]
    %v184 = vld [vmem:[#allocation6 + $0x28] sm:$0xff]
    %v185 = vld [vmem:[#allocation6 + $0x30] sm:$0xff]
    %v186 = vld [vmem:[#allocation6 + $0x38] sm:$0xff]
    %v187 = vld [vmem:[#allocation6 + $0x40] sm:$0xff]
    %v188 = vld [vmem:[#allocation6 + $0x48] sm:$0xff]
    %v189 = vld [vmem:[#allocation6 + $0x50] sm:$0xff]
    %v190 = vld [vmem:[#allocation6 + $0x58] sm:$0xff]
    %v191 = vld [vmem:[#allocation6 + $0x60] sm:$0xff]
    %v192 = vld [vmem:[#allocation6 + $0x68] sm:$0xff]
    %v193 = vld [vmem:[#allocation6 + $0x70] sm:$0xff]
    %v194 = vld [vmem:[#allocation6 + $0x78] sm:$0xff]
    %s195 = scalar_lea.vmem [#allocation2], 1
    %v196 = vld [vmem:[%s195] ss:$8 sm:$0xf]
    %v198 = vlaneseq
    %v199 = vshrl.u32 %v198, 7
    %v200 = vsub.s32 0, %v199
    %v201 = vrot.slane %v196, %v200
    %v202 = vlaneseq
    %v203 = vshrl.u32 %v202, 7
    %v204 = vsub.s32 1, %v203
    %v205 = vrot.slane %v196, %v204
    %v206 = vlaneseq
    %v207 = vshrl.u32 %v206, 7
    %v208 = vsub.s32 2, %v207
    %v209 = vrot.slane %v196, %v208
    %v210 = vlaneseq
    %v211 = vshrl.u32 %v210, 7
    %v212 = vsub.s32 3, %v211
    %v213 = vrot.slane %v196, %v212
    %v234 = vunpack.c.l.b16 %v179
    %v235 = vunpack.c.h.b16 %v179
    %v236 = vunpack.c.l.b16 %v180
    %v237 = vunpack.c.h.b16 %v180
    %v238 = vunpack.c.l.b16 %v181
    %v239 = vunpack.c.h.b16 %v181
    %v240 = vunpack.c.l.b16 %v182
    %v241 = vunpack.c.h.b16 %v182
    %v242 = vunpack.c.l.b16 %v183
    %v243 = vunpack.c.h.b16 %v183
    %v244 = vunpack.c.l.b16 %v184
    %v245 = vunpack.c.h.b16 %v184
    %v246 = vunpack.c.l.b16 %v185
    %v247 = vunpack.c.h.b16 %v185
    %v248 = vunpack.c.l.b16 %v186
    %v249 = vunpack.c.h.b16 %v186
    %v250 = vunpack.c.l.b16 %v187
    %v251 = vunpack.c.h.b16 %v187
    %v252 = vunpack.c.l.b16 %v188
    %v253 = vunpack.c.h.b16 %v188
    %v254 = vunpack.c.l.b16 %v189
    %v255 = vunpack.c.h.b16 %v189
    %v256 = vunpack.c.l.b16 %v190
    %v257 = vunpack.c.h.b16 %v190
    %v258 = vunpack.c.l.b16 %v191
    %v259 = vunpack.c.h.b16 %v191
    %v260 = vunpack.c.l.b16 %v192
    %v261 = vunpack.c.h.b16 %v192
    %v262 = vunpack.c.l.b16 %v193
    %v263 = vunpack.c.h.b16 %v193
    %v264 = vunpack.c.l.b16 %v194
    %v265 = vunpack.c.h.b16 %v194
    %v266 = vpack.c.b16 %v238, %v234
    %v267 = vpack.c.b16 %v239, %v235
    %v268 = vpack.c.b16 %v240, %v236
    %v269 = vpack.c.b16 %v241, %v237
    %v270 = vpack.c.b16 %v246, %v242
    %v271 = vpack.c.b16 %v247, %v243
    %v272 = vpack.c.b16 %v248, %v244
    %v273 = vpack.c.b16 %v249, %v245
    %v274 = vpack.c.b16 %v254, %v250
    %v275 = vpack.c.b16 %v255, %v251
    %v276 = vpack.c.b16 %v256, %v252
    %v277 = vpack.c.b16 %v257, %v253
    %v278 = vpack.c.b16 %v262, %v258
    %v279 = vpack.c.b16 %v263, %v259
    %v280 = vpack.c.b16 %v264, %v260
    %v281 = vpack.c.b16 %v265, %v261
    %vm298 = vcmask 523264
    %v300 = vsel %vm298, %v178, 0
    %302 = vmatprep.subr.bf16.mxu0 0
    %303 = vmatpush1.bf16.msra.mxu0 0
    %304 = vmatprep.subr.bf16.mxu0 0
    %305 = vmatpush1.bf16.msra.mxu0 0
    %306 = vmatprep.subr.bf16.mxu0 0
    %307 = vmatpush1.bf16.msra.mxu0 0
    %308 = vmatprep.subr.bf16.mxu0 0
    %309 = vmatpush1.bf16.msra.mxu0 0
    %310 = vmatprep.subr.bf16.mxu0 %v279
    %311 = vmatpush1.bf16.msra.mxu0 %v278
    %312 = vmatprep.subr.bf16.mxu0 %v275
    %313 = vmatpush1.bf16.msra.mxu0 %v274
    %314 = vmatprep.subr.bf16.mxu0 %v271
    %315 = vmatpush1.bf16.msra.mxu0 %v270
    %316 = vmatprep.subr.bf16.mxu0 %v267
    %317 = vmatpush1.bf16.msra.mxu0 %v266
    %318 = vmatprep.subr.bf16.mxu0 0
    %319 = vmatpush2.bf16.msra.mxu0 0
    %320 = vmatprep.subr.bf16.mxu0 0
    %321 = vmatpush2.bf16.msra.mxu0 0
    %322 = vmatprep.subr.bf16.mxu0 0
    %323 = vmatpush2.bf16.msra.mxu0 0
    %324 = vmatprep.subr.bf16.mxu0 0
    %325 = vmatpush2.bf16.msra.mxu0 0
    %326 = vmatprep.subr.bf16.mxu0 0
    %327 = vmatpush2.bf16.msra.mxu0 0
    %328 = vmatprep.subr.bf16.mxu0 0
    %329 = vmatpush2.bf16.msra.mxu0 0
    %330 = vmatprep.subr.bf16.mxu0 0
    %331 = vmatpush2.bf16.msra.mxu0 0
    %332 = vmatprep.subr.bf16.mxu0 0
    %333 = vmatpush2.bf16.msra.mxu0 0
    %334 = vmatprep.mubr.bf16.mxu0 0
    %335 = vmatmul.mubr.bf16.gmra.mxu0 %v300
    %v336 = vpop.f32.mrf.mxu0
    %v337 = vadd.f32 %v201, %v336
    %v338 = vpop.f32.mrf.mxu0
    %v339 = vadd.f32 %v205, %v338
    %v340 = vpop.f32.mrf.mxu0
    %v341 = vpop.f32.mrf.mxu0
    %342 = vdwg.mxu0
    %343 = vmatprep.subr.bf16.mxu0 0
    %344 = vmatpush1.bf16.msra.mxu0 0
    %345 = vmatprep.subr.bf16.mxu0 0
    %346 = vmatpush1.bf16.msra.mxu0 0
    %347 = vmatprep.subr.bf16.mxu0 0
    %348 = vmatpush1.bf16.msra.mxu0 0
    %349 = vmatprep.subr.bf16.mxu0 0
    %350 = vmatpush1.bf16.msra.mxu0 0
    %351 = vmatprep.subr.bf16.mxu0 %v281
    %352 = vmatpush1.bf16.msra.mxu0 %v280
    %353 = vmatprep.subr.bf16.mxu0 %v277
    %354 = vmatpush1.bf16.msra.mxu0 %v276
    %355 = vmatprep.subr.bf16.mxu0 %v273
    %356 = vmatpush1.bf16.msra.mxu0 %v272
    %357 = vmatprep.subr.bf16.mxu0 %v269
    %358 = vmatpush1.bf16.msra.mxu0 %v268
    %359 = vmatprep.subr.bf16.mxu0 0
    %360 = vmatpush2.bf16.msra.mxu0 0
    %361 = vmatprep.subr.bf16.mxu0 0
    %362 = vmatpush2.bf16.msra.mxu0 0
    %363 = vmatprep.subr.bf16.mxu0 0
    %364 = vmatpush2.bf16.msra.mxu0 0
    %365 = vmatprep.subr.bf16.mxu0 0
    %366 = vmatpush2.bf16.msra.mxu0 0
    %367 = vmatprep.subr.bf16.mxu0 0
    %368 = vmatpush2.bf16.msra.mxu0 0
    %369 = vmatprep.subr.bf16.mxu0 0
    %370 = vmatpush2.bf16.msra.mxu0 0
    %371 = vmatprep.subr.bf16.mxu0 0
    %372 = vmatpush2.bf16.msra.mxu0 0
    %373 = vmatprep.subr.bf16.mxu0 0
    %374 = vmatpush2.bf16.msra.mxu0 0
    %375 = vmatprep.mubr.bf16.mxu0 0
    %376 = vmatmul.mubr.bf16.gmra.mxu0 %v300
    %v377 = vpop.f32.mrf.mxu0
    %v378 = vadd.f32 %v209, %v377
    %v379 = vpop.f32.mrf.mxu0
    %v380 = vadd.f32 %v213, %v379
    %v381 = vpop.f32.mrf.mxu0
    %v382 = vpop.f32.mrf.mxu0
    %383 = vdwg.mxu0
    %v384 = vmax.f32 %v337, 0.0
    %v385 = vmax.f32 %v339, 0.0
    %v386 = vmax.f32 %v378, 0.0
    %v387 = vmax.f32 %v380, 0.0
    %v388 = vpack.c.bf16 %v384, %v384
    %v389 = vpack.c.bf16 %v385, %v385
    %v390 = vpack.c.bf16 %v386, %v386
    %v391 = vpack.c.bf16 %v387, %v387
    %v392 = vld [vmem:[#allocation7] sm:$0xff]
    %v393 = vld [vmem:[#allocation7 + $0x8] sm:$0xff]
    %v394 = vld [vmem:[#allocation7 + $0x10] sm:$0xff]
    %v395 = vld [vmem:[#allocation7 + $0x18] sm:$0xff]
    %v396 = vld [vmem:[#allocation7 + $0x20] sm:$0xff]
    %v397 = vld [vmem:[#allocation7 + $0x28] sm:$0xff]
    %v398 = vld [vmem:[#allocation7 + $0x30] sm:$0xff]
    %v399 = vld [vmem:[#allocation7 + $0x38] sm:$0xff]
    %v400 = vld [vmem:[#allocation7 + $0x40] sm:$0xff]
    %v401 = vld [vmem:[#allocation7 + $0x48] sm:$0xff]
    %v402 = vld [vmem:[#allocation7 + $0x50] sm:$0xff]
    %v403 = vld [vmem:[#allocation7 + $0x58] sm:$0xff]
    %v404 = vld [vmem:[#allocation7 + $0x60] sm:$0xff]
    %v405 = vld [vmem:[#allocation7 + $0x68] sm:$0xff]
    %v406 = vld [vmem:[#allocation7 + $0x70] sm:$0xff]
    %v407 = vld [vmem:[#allocation7 + $0x78] sm:$0xff]
    %v408 = vld [vmem:[#allocation7 + $0x80] sm:$0xff]
    %v409 = vld [vmem:[#allocation7 + $0x88] sm:$0xff]
    %v410 = vld [vmem:[#allocation7 + $0x90] sm:$0xff]
    %v411 = vld [vmem:[#allocation7 + $0x98] sm:$0xff]
    %v412 = vld [vmem:[#allocation7 + $0xa0] sm:$0xff]
    %v413 = vld [vmem:[#allocation7 + $0xa8] sm:$0xff]
    %v414 = vld [vmem:[#allocation7 + $0xb0] sm:$0xff]
    %v415 = vld [vmem:[#allocation7 + $0xb8] sm:$0xff]
    %v416 = vld [vmem:[#allocation7 + $0xc0] sm:$0xff]
    %v417 = vld [vmem:[#allocation7 + $0xc8] sm:$0xff]
    %v418 = vld [vmem:[#allocation7 + $0xd0] sm:$0xff]
    %v419 = vld [vmem:[#allocation7 + $0xd8] sm:$0xff]
    %v420 = vld [vmem:[#allocation7 + $0xe0] sm:$0xff]
    %v421 = vld [vmem:[#allocation7 + $0xe8] sm:$0xff]
    %v422 = vld [vmem:[#allocation7 + $0xf0] sm:$0xff]
    %v423 = vld [vmem:[#allocation7 + $0xf8] sm:$0xff]
    %v424 = vld [vmem:[#allocation7 + $0x100] sm:$0xff]
    %v425 = vld [vmem:[#allocation7 + $0x108] sm:$0xff]
    %v426 = vld [vmem:[#allocation7 + $0x110] sm:$0xff]
    %v427 = vld [vmem:[#allocation7 + $0x118] sm:$0xff]
    %v428 = vld [vmem:[#allocation7 + $0x120] sm:$0xff]
    %v429 = vld [vmem:[#allocation7 + $0x128] sm:$0xff]
    %v430 = vld [vmem:[#allocation7 + $0x130] sm:$0xff]
    %v431 = vld [vmem:[#allocation7 + $0x138] sm:$0xff]
    %v432 = vld [vmem:[#allocation7 + $0x140] sm:$0xff]
    %v433 = vld [vmem:[#allocation7 + $0x148] sm:$0xff]
    %v434 = vld [vmem:[#allocation7 + $0x150] sm:$0xff]
    %v435 = vld [vmem:[#allocation7 + $0x158] sm:$0xff]
    %v436 = vld [vmem:[#allocation7 + $0x160] sm:$0xff]
    %v437 = vld [vmem:[#allocation7 + $0x168] sm:$0xff]
    %v438 = vld [vmem:[#allocation7 + $0x170] sm:$0xff]
    %v439 = vld [vmem:[#allocation7 + $0x178] sm:$0xff]
    %v440 = vld [vmem:[#allocation7 + $0x180] sm:$0xff]
    %v441 = vld [vmem:[#allocation7 + $0x188] sm:$0xff]
    %v442 = vld [vmem:[#allocation7 + $0x190] sm:$0xff]
    %v443 = vld [vmem:[#allocation7 + $0x198] sm:$0xff]
    %v444 = vld [vmem:[#allocation7 + $0x1a0] sm:$0xff]
    %v445 = vld [vmem:[#allocation7 + $0x1a8] sm:$0xff]
    %v446 = vld [vmem:[#allocation7 + $0x1b0] sm:$0xff]
    %v447 = vld [vmem:[#allocation7 + $0x1b8] sm:$0xff]
    %v448 = vld [vmem:[#allocation7 + $0x1c0] sm:$0xff]
    %v449 = vld [vmem:[#allocation7 + $0x1c8] sm:$0xff]
    %v450 = vld [vmem:[#allocation7 + $0x1d0] sm:$0xff]
    %v451 = vld [vmem:[#allocation7 + $0x1d8] sm:$0xff]
    %v452 = vld [vmem:[#allocation7 + $0x1e0] sm:$0xff]
    %v453 = vld [vmem:[#allocation7 + $0x1e8] sm:$0xff]
    %v454 = vld [vmem:[#allocation7 + $0x1f0] sm:$0xff]
    %v455 = vld [vmem:[#allocation7 + $0x1f8] sm:$0xff]
    %s456 = scalar_lea.vmem [#allocation2], 2
    %v457 = vld [vmem:[%s456] ss:$8 sm:$0x3]
    %v459 = vlaneseq
    %v460 = vshrl.u32 %v459, 7
    %v461 = vsub.s32 0, %v460
    %v462 = vrot.slane %v457, %v461
    %v463 = vlaneseq
    %v464 = vshrl.u32 %v463, 7
    %v465 = vsub.s32 1, %v464
    %v466 = vrot.slane %v457, %v465
    %v533 = vunpack.c.l.b16 %v392
    %v534 = vunpack.c.h.b16 %v392
    %v535 = vunpack.c.l.b16 %v393
    %v536 = vunpack.c.h.b16 %v393
    %v537 = vunpack.c.l.b16 %v394
    %v538 = vunpack.c.h.b16 %v394
    %v539 = vunpack.c.l.b16 %v395
    %v540 = vunpack.c.h.b16 %v395
    %v541 = vunpack.c.l.b16 %v396
    %v542 = vunpack.c.h.b16 %v396
    %v543 = vunpack.c.l.b16 %v397
    %v544 = vunpack.c.h.b16 %v397
    %v545 = vunpack.c.l.b16 %v398
    %v546 = vunpack.c.h.b16 %v398
    %v547 = vunpack.c.l.b16 %v399
    %v548 = vunpack.c.h.b16 %v399
    %v549 = vunpack.c.l.b16 %v400
    %v550 = vunpack.c.h.b16 %v400
    %v551 = vunpack.c.l.b16 %v401
    %v552 = vunpack.c.h.b16 %v401
    %v553 = vunpack.c.l.b16 %v402
    %v554 = vunpack.c.h.b16 %v402
    %v555 = vunpack.c.l.b16 %v403
    %v556 = vunpack.c.h.b16 %v403
    %v557 = vunpack.c.l.b16 %v404
    %v558 = vunpack.c.h.b16 %v404
    %v559 = vunpack.c.l.b16 %v405
    %v560 = vunpack.c.h.b16 %v405
    %v561 = vunpack.c.l.b16 %v406
    %v562 = vunpack.c.h.b16 %v406
    %v563 = vunpack.c.l.b16 %v407
    %v564 = vunpack.c.h.b16 %v407
    %v565 = vunpack.c.l.b16 %v408
    %v566 = vunpack.c.h.b16 %v408
    %v567 = vunpack.c.l.b16 %v409
    %v568 = vunpack.c.h.b16 %v409
    %v569 = vunpack.c.l.b16 %v410
    %v570 = vunpack.c.h.b16 %v410
    %v571 = vunpack.c.l.b16 %v411
    %v572 = vunpack.c.h.b16 %v411
    %v573 = vunpack.c.l.b16 %v412
    %v574 = vunpack.c.h.b16 %v412
    %v575 = vunpack.c.l.b16 %v413
    %v576 = vunpack.c.h.b16 %v413
    %v577 = vunpack.c.l.b16 %v414
    %v578 = vunpack.c.h.b16 %v414
    %v579 = vunpack.c.l.b16 %v415
    %v580 = vunpack.c.h.b16 %v415
    %v581 = vunpack.c.l.b16 %v416
    %v582 = vunpack.c.h.b16 %v416
    %v583 = vunpack.c.l.b16 %v417
    %v584 = vunpack.c.h.b16 %v417
    %v585 = vunpack.c.l.b16 %v418
    %v586 = vunpack.c.h.b16 %v418
    %v587 = vunpack.c.l.b16 %v419
    %v588 = vunpack.c.h.b16 %v419
    %v589 = vunpack.c.l.b16 %v420
    %v590 = vunpack.c.h.b16 %v420
    %v591 = vunpack.c.l.b16 %v421
    %v592 = vunpack.c.h.b16 %v421
    %v593 = vunpack.c.l.b16 %v422
    %v594 = vunpack.c.h.b16 %v422
    %v595 = vunpack.c.l.b16 %v423
    %v596 = vunpack.c.h.b16 %v423
    %v597 = vunpack.c.l.b16 %v424
    %v598 = vunpack.c.h.b16 %v424
    %v599 = vunpack.c.l.b16 %v425
    %v600 = vunpack.c.h.b16 %v425
    %v601 = vunpack.c.l.b16 %v426
    %v602 = vunpack.c.h.b16 %v426
    %v603 = vunpack.c.l.b16 %v427
    %v604 = vunpack.c.h.b16 %v427
    %v605 = vunpack.c.l.b16 %v428
    %v606 = vunpack.c.h.b16 %v428
    %v607 = vunpack.c.l.b16 %v429
    %v608 = vunpack.c.h.b16 %v429
    %v609 = vunpack.c.l.b16 %v430
    %v610 = vunpack.c.h.b16 %v430
    %v611 = vunpack.c.l.b16 %v431
    %v612 = vunpack.c.h.b16 %v431
    %v613 = vunpack.c.l.b16 %v432
    %v614 = vunpack.c.h.b16 %v432
    %v615 = vunpack.c.l.b16 %v433
    %v616 = vunpack.c.h.b16 %v433
    %v617 = vunpack.c.l.b16 %v434
    %v618 = vunpack.c.h.b16 %v434
    %v619 = vunpack.c.l.b16 %v435
    %v620 = vunpack.c.h.b16 %v435
    %v621 = vunpack.c.l.b16 %v436
    %v622 = vunpack.c.h.b16 %v436
    %v623 = vunpack.c.l.b16 %v437
    %v624 = vunpack.c.h.b16 %v437
    %v625 = vunpack.c.l.b16 %v438
    %v626 = vunpack.c.h.b16 %v438
    %v627 = vunpack.c.l.b16 %v439
    %v628 = vunpack.c.h.b16 %v439
    %v629 = vunpack.c.l.b16 %v440
    %v630 = vunpack.c.h.b16 %v440
    %v631 = vunpack.c.l.b16 %v441
    %v632 = vunpack.c.h.b16 %v441
    %v633 = vunpack.c.l.b16 %v442
    %v634 = vunpack.c.h.b16 %v442
    %v635 = vunpack.c.l.b16 %v443
    %v636 = vunpack.c.h.b16 %v443
    %v637 = vunpack.c.l.b16 %v444
    %v638 = vunpack.c.h.b16 %v444
    %v639 = vunpack.c.l.b16 %v445
    %v640 = vunpack.c.h.b16 %v445
    %v641 = vunpack.c.l.b16 %v446
    %v642 = vunpack.c.h.b16 %v446
    %v643 = vunpack.c.l.b16 %v447
    %v644 = vunpack.c.h.b16 %v447
    %v645 = vunpack.c.l.b16 %v448
    %v646 = vunpack.c.h.b16 %v448
    %v647 = vunpack.c.l.b16 %v449
    %v648 = vunpack.c.h.b16 %v449
    %v649 = vunpack.c.l.b16 %v450
    %v650 = vunpack.c.h.b16 %v450
    %v651 = vunpack.c.l.b16 %v451
    %v652 = vunpack.c.h.b16 %v451
    %v653 = vunpack.c.l.b16 %v452
    %v654 = vunpack.c.h.b16 %v452
    %v655 = vunpack.c.l.b16 %v453
    %v656 = vunpack.c.h.b16 %v453
    %v657 = vunpack.c.l.b16 %v454
    %v658 = vunpack.c.h.b16 %v454
    %v659 = vunpack.c.l.b16 %v455
    %v660 = vunpack.c.h.b16 %v455
    %v661 = vpack.c.b16 %v535, %v533
    %v662 = vpack.c.b16 %v536, %v534
    %v663 = vpack.c.b16 %v539, %v537
    %v664 = vpack.c.b16 %v540, %v538
    %v665 = vpack.c.b16 %v543, %v541
    %v666 = vpack.c.b16 %v544, %v542
    %v667 = vpack.c.b16 %v547, %v545
    %v668 = vpack.c.b16 %v548, %v546
    %v669 = vpack.c.b16 %v551, %v549
    %v670 = vpack.c.b16 %v552, %v550
    %v671 = vpack.c.b16 %v555, %v553
    %v672 = vpack.c.b16 %v556, %v554
    %v673 = vpack.c.b16 %v559, %v557
    %v674 = vpack.c.b16 %v560, %v558
    %v675 = vpack.c.b16 %v563, %v561
    %v676 = vpack.c.b16 %v564, %v562
    %v677 = vpack.c.b16 %v567, %v565
    %v678 = vpack.c.b16 %v568, %v566
    %v679 = vpack.c.b16 %v571, %v569
    %v680 = vpack.c.b16 %v572, %v570
    %v681 = vpack.c.b16 %v575, %v573
    %v682 = vpack.c.b16 %v576, %v574
    %v683 = vpack.c.b16 %v579, %v577
    %v684 = vpack.c.b16 %v580, %v578
    %v685 = vpack.c.b16 %v583, %v581
    %v686 = vpack.c.b16 %v584, %v582
    %v687 = vpack.c.b16 %v587, %v585
    %v688 = vpack.c.b16 %v588, %v586
    %v689 = vpack.c.b16 %v591, %v589
    %v690 = vpack.c.b16 %v592, %v590
    %v691 = vpack.c.b16 %v595, %v593
    %v692 = vpack.c.b16 %v596, %v594
    %v693 = vpack.c.b16 %v599, %v597
    %v694 = vpack.c.b16 %v600, %v598
    %v695 = vpack.c.b16 %v603, %v601
    %v696 = vpack.c.b16 %v604, %v602
    %v697 = vpack.c.b16 %v607, %v605
    %v698 = vpack.c.b16 %v608, %v606
    %v699 = vpack.c.b16 %v611, %v609
    %v700 = vpack.c.b16 %v612, %v610
    %v701 = vpack.c.b16 %v615, %v613
    %v702 = vpack.c.b16 %v616, %v614
    %v703 = vpack.c.b16 %v619, %v617
    %v704 = vpack.c.b16 %v620, %v618
    %v705 = vpack.c.b16 %v623, %v621
    %v706 = vpack.c.b16 %v624, %v622
    %v707 = vpack.c.b16 %v627, %v625
    %v708 = vpack.c.b16 %v628, %v626
    %v709 = vpack.c.b16 %v631, %v629
    %v710 = vpack.c.b16 %v632, %v630
    %v711 = vpack.c.b16 %v635, %v633
    %v712 = vpack.c.b16 %v636, %v634
    %v713 = vpack.c.b16 %v639, %v637
    %v714 = vpack.c.b16 %v640, %v638
    %v715 = vpack.c.b16 %v643, %v641
    %v716 = vpack.c.b16 %v644, %v642
    %v717 = vpack.c.b16 %v647, %v645
    %v718 = vpack.c.b16 %v648, %v646
    %v719 = vpack.c.b16 %v651, %v649
    %v720 = vpack.c.b16 %v652, %v650
    %v721 = vpack.c.b16 %v655, %v653
    %v722 = vpack.c.b16 %v656, %v654
    %v723 = vpack.c.b16 %v659, %v657
    %v724 = vpack.c.b16 %v660, %v658
    %789 = vmatprep.subr.bf16.mxu0 %v676
    %790 = vmatpush1.bf16.msra.mxu0 %v675
    %791 = vmatprep.subr.bf16.mxu0 %v674
    %792 = vmatpush1.bf16.msra.mxu0 %v673
    %793 = vmatprep.subr.bf16.mxu0 %v672
    %794 = vmatpush1.bf16.msra.mxu0 %v671
    %795 = vmatprep.subr.bf16.mxu0 %v670
    %796 = vmatpush1.bf16.msra.mxu0 %v669
    %797 = vmatprep.subr.bf16.mxu0 %v668
    %798 = vmatpush1.bf16.msra.mxu0 %v667
    %799 = vmatprep.subr.bf16.mxu0 %v666
    %800 = vmatpush1.bf16.msra.mxu0 %v665
    %801 = vmatprep.subr.bf16.mxu0 %v664
    %802 = vmatpush1.bf16.msra.mxu0 %v663
    %803 = vmatprep.subr.bf16.mxu0 %v662
    %804 = vmatpush1.bf16.msra.mxu0 %v661
    %805 = vmatprep.subr.bf16.mxu0 %v692
    %806 = vmatpush2.bf16.msra.mxu0 %v691
    %807 = vmatprep.subr.bf16.mxu0 %v690
    %808 = vmatpush2.bf16.msra.mxu0 %v689
    %809 = vmatprep.subr.bf16.mxu0 %v688
    %810 = vmatpush2.bf16.msra.mxu0 %v687
    %811 = vmatprep.subr.bf16.mxu0 %v686
    %812 = vmatpush2.bf16.msra.mxu0 %v685
    %813 = vmatprep.subr.bf16.mxu0 %v684
    %814 = vmatpush2.bf16.msra.mxu0 %v683
    %815 = vmatprep.subr.bf16.mxu0 %v682
    %816 = vmatpush2.bf16.msra.mxu0 %v681
    %817 = vmatprep.subr.bf16.mxu0 %v680
    %818 = vmatpush2.bf16.msra.mxu0 %v679
    %819 = vmatprep.subr.bf16.mxu0 %v678
    %820 = vmatpush2.bf16.msra.mxu0 %v677
    %821 = vmatprep.mubr.bf16.mxu0 %v389
    %822 = vmatmul.mubr.bf16.gmra.mxu0 %v388
    %v823 = vpop.f32.mrf.mxu0
    %v824 = vadd.f32 %v462, %v823
    %v825 = vpop.f32.mrf.mxu0
    %v826 = vadd.f32 %v466, %v825
    %v827 = vpop.f32.mrf.mxu0
    %v828 = vpop.f32.mrf.mxu0
    %829 = vdwg.mxu0
    %830 = vmatprep.subr.bf16.mxu0 %v708
    %831 = vmatpush1.bf16.msra.mxu0 %v707
    %832 = vmatprep.subr.bf16.mxu0 %v706
    %833 = vmatpush1.bf16.msra.mxu0 %v705
    %834 = vmatprep.subr.bf16.mxu0 %v704
    %835 = vmatpush1.bf16.msra.mxu0 %v703
    %836 = vmatprep.subr.bf16.mxu0 %v702
    %837 = vmatpush1.bf16.msra.mxu0 %v701
    %838 = vmatprep.subr.bf16.mxu0 %v700
    %839 = vmatpush1.bf16.msra.mxu0 %v699
    %840 = vmatprep.subr.bf16.mxu0 %v698
    %841 = vmatpush1.bf16.msra.mxu0 %v697
    %842 = vmatprep.subr.bf16.mxu0 %v696
    %843 = vmatpush1.bf16.msra.mxu0 %v695
    %844 = vmatprep.subr.bf16.mxu0 %v694
    %845 = vmatpush1.bf16.msra.mxu0 %v693
    %846 = vmatprep.subr.bf16.mxu0 %v724
    %847 = vmatpush2.bf16.msra.mxu0 %v723
    %848 = vmatprep.subr.bf16.mxu0 %v722
    %849 = vmatpush2.bf16.msra.mxu0 %v721
    %850 = vmatprep.subr.bf16.mxu0 %v720
    %851 = vmatpush2.bf16.msra.mxu0 %v719
    %852 = vmatprep.subr.bf16.mxu0 %v718
    %853 = vmatpush2.bf16.msra.mxu0 %v717
    %854 = vmatprep.subr.bf16.mxu0 %v716
    %855 = vmatpush2.bf16.msra.mxu0 %v715
    %856 = vmatprep.subr.bf16.mxu0 %v714
    %857 = vmatpush2.bf16.msra.mxu0 %v713
    %858 = vmatprep.subr.bf16.mxu0 %v712
    %859 = vmatpush2.bf16.msra.mxu0 %v711
    %860 = vmatprep.subr.bf16.mxu0 %v710
    %861 = vmatpush2.bf16.msra.mxu0 %v709
    %862 = vmatprep.mubr.bf16.mxu0 %v391
    %863 = vmatmul.mubr.bf16.gmra.mxu0 %v390
    %v864 = vpop.f32.mrf.mxu0
    %v865 = vadd.f32 %v824, %v864
    %v866 = vpop.f32.mrf.mxu0
    %v867 = vadd.f32 %v826, %v866
    %v868 = vpop.f32.mrf.mxu0
    %v869 = vpop.f32.mrf.mxu0
    %870 = vdwg.mxu0
    %v871 = vmax.f32 %v865, 0.0
    %v872 = vmax.f32 %v867, 0.0
    %v873 = vpack.c.bf16 %v871, %v871
    %v874 = vpack.c.bf16 %v872, %v872
    %v875 = vld [vmem:[#allocation9] sm:$0xf]
    %v876 = vld [vmem:[#allocation9 + $0x4] sm:$0xf]
    %v877 = vld [vmem:[#allocation9 + $0x8] sm:$0xf]
    %v878 = vld [vmem:[#allocation9 + $0xc] sm:$0xf]
    %v879 = vld [vmem:[#allocation9 + $0x10] sm:$0xf]
    %v880 = vld [vmem:[#allocation9 + $0x14] sm:$0xf]
    %v881 = vld [vmem:[#allocation9 + $0x18] sm:$0xf]
    %v882 = vld [vmem:[#allocation9 + $0x1c] sm:$0xf]
    %v883 = vld [vmem:[#allocation9 + $0x20] sm:$0xf]
    %v884 = vld [vmem:[#allocation9 + $0x24] sm:$0xf]
    %v885 = vld [vmem:[#allocation9 + $0x28] sm:$0xf]
    %v886 = vld [vmem:[#allocation9 + $0x2c] sm:$0xf]
    %v887 = vld [vmem:[#allocation9 + $0x30] sm:$0xf]
    %v888 = vld [vmem:[#allocation9 + $0x34] sm:$0xf]
    %v889 = vld [vmem:[#allocation9 + $0x38] sm:$0xf]
    %v890 = vld [vmem:[#allocation9 + $0x3c] sm:$0xf]
    %v891 = vld [vmem:[#allocation9 + $0x40] sm:$0xf]
    %v892 = vld [vmem:[#allocation9 + $0x44] sm:$0xf]
    %v893 = vld [vmem:[#allocation9 + $0x48] sm:$0xf]
    %v894 = vld [vmem:[#allocation9 + $0x4c] sm:$0xf]
    %v895 = vld [vmem:[#allocation9 + $0x50] sm:$0xf]
    %v896 = vld [vmem:[#allocation9 + $0x54] sm:$0xf]
    %v897 = vld [vmem:[#allocation9 + $0x58] sm:$0xf]
    %v898 = vld [vmem:[#allocation9 + $0x5c] sm:$0xf]
    %v899 = vld [vmem:[#allocation9 + $0x60] sm:$0xf]
    %v900 = vld [vmem:[#allocation9 + $0x64] sm:$0xf]
    %v901 = vld [vmem:[#allocation9 + $0x68] sm:$0xf]
    %v902 = vld [vmem:[#allocation9 + $0x6c] sm:$0xf]
    %v903 = vld [vmem:[#allocation9 + $0x70] sm:$0xf]
    %v904 = vld [vmem:[#allocation9 + $0x74] sm:$0xf]
    %v905 = vld [vmem:[#allocation9 + $0x78] sm:$0xf]
    %v906 = vld [vmem:[#allocation9 + $0x7c] sm:$0xf]
    %v907 = vld [vmem:[#allocation2 + $0x3] ss:$0 sm:$0xff]
    %v940 = vunpack.c.l.b16 %v875
    %v941 = vunpack.c.l.b16 %v876
    %v942 = vunpack.c.l.b16 %v877
    %v943 = vunpack.c.l.b16 %v878
    %v944 = vunpack.c.l.b16 %v879
    %v945 = vunpack.c.l.b16 %v880
    %v946 = vunpack.c.l.b16 %v881
    %v947 = vunpack.c.l.b16 %v882
    %v948 = vunpack.c.l.b16 %v883
    %v949 = vunpack.c.l.b16 %v884
    %v950 = vunpack.c.l.b16 %v885
    %v951 = vunpack.c.l.b16 %v886
    %v952 = vunpack.c.l.b16 %v887
    %v953 = vunpack.c.l.b16 %v888
    %v954 = vunpack.c.l.b16 %v889
    %v955 = vunpack.c.l.b16 %v890
    %v956 = vunpack.c.l.b16 %v891
    %v957 = vunpack.c.l.b16 %v892
    %v958 = vunpack.c.l.b16 %v893
    %v959 = vunpack.c.l.b16 %v894
    %v960 = vunpack.c.l.b16 %v895
    %v961 = vunpack.c.l.b16 %v896
    %v962 = vunpack.c.l.b16 %v897
    %v963 = vunpack.c.l.b16 %v898
    %v964 = vunpack.c.l.b16 %v899
    %v965 = vunpack.c.l.b16 %v900
    %v966 = vunpack.c.l.b16 %v901
    %v967 = vunpack.c.l.b16 %v902
    %v968 = vunpack.c.l.b16 %v903
    %v969 = vunpack.c.l.b16 %v904
    %v970 = vunpack.c.l.b16 %v905
    %v971 = vunpack.c.l.b16 %v906
    %v972 = vpack.c.b16 %v941, %v940
    %v973 = vpack.c.b16 %v943, %v942
    %v974 = vpack.c.b16 %v945, %v944
    %v975 = vpack.c.b16 %v947, %v946
    %v976 = vpack.c.b16 %v949, %v948
    %v977 = vpack.c.b16 %v951, %v950
    %v978 = vpack.c.b16 %v953, %v952
    %v979 = vpack.c.b16 %v955, %v954
    %v980 = vpack.c.b16 %v957, %v956
    %v981 = vpack.c.b16 %v959, %v958
    %v982 = vpack.c.b16 %v961, %v960
    %v983 = vpack.c.b16 %v963, %v962
    %v984 = vpack.c.b16 %v965, %v964
    %v985 = vpack.c.b16 %v967, %v966
    %v986 = vpack.c.b16 %v969, %v968
    %v987 = vpack.c.b16 %v971, %v970
    %1004 = vmatprep.subr.bf16.mxu0 0
    %1005 = vmatpush1.bf16.msra.mxu0 %v979
    %1006 = vmatprep.subr.bf16.mxu0 0
    %1007 = vmatpush1.bf16.msra.mxu0 %v978
    %1008 = vmatprep.subr.bf16.mxu0 0
    %1009 = vmatpush1.bf16.msra.mxu0 %v977
    %1010 = vmatprep.subr.bf16.mxu0 0
    %1011 = vmatpush1.bf16.msra.mxu0 %v976
    %1012 = vmatprep.subr.bf16.mxu0 0
    %1013 = vmatpush1.bf16.msra.mxu0 %v975
    %1014 = vmatprep.subr.bf16.mxu0 0
    %1015 = vmatpush1.bf16.msra.mxu0 %v974
    %1016 = vmatprep.subr.bf16.mxu0 0
    %1017 = vmatpush1.bf16.msra.mxu0 %v973
    %1018 = vmatprep.subr.bf16.mxu0 0
    %1019 = vmatpush1.bf16.msra.mxu0 %v972
    %1020 = vmatprep.subr.bf16.mxu0 0
    %1021 = vmatpush2.bf16.msra.mxu0 %v987
    %1022 = vmatprep.subr.bf16.mxu0 0
    %1023 = vmatpush2.bf16.msra.mxu0 %v986
    %1024 = vmatprep.subr.bf16.mxu0 0
    %1025 = vmatpush2.bf16.msra.mxu0 %v985
    %1026 = vmatprep.subr.bf16.mxu0 0
    %1027 = vmatpush2.bf16.msra.mxu0 %v984
    %1028 = vmatprep.subr.bf16.mxu0 0
    %1029 = vmatpush2.bf16.msra.mxu0 %v983
    %1030 = vmatprep.subr.bf16.mxu0 0
    %1031 = vmatpush2.bf16.msra.mxu0 %v982
    %1032 = vmatprep.subr.bf16.mxu0 0
    %1033 = vmatpush2.bf16.msra.mxu0 %v981
    %1034 = vmatprep.subr.bf16.mxu0 0
    %1035 = vmatpush2.bf16.msra.mxu0 %v980
    %1036 = vmatprep.mubr.bf16.mxu0 %v874
    %1037 = vmatmul.mubr.bf16.gmra.mxu0 %v873
    %v1038 = vpop.f32.mrf.mxu0
    %v1039 = vadd.f32 %v907, %v1038
    %v1040 = vpop.f32.mrf.mxu0
    %v1041 = vpop.f32.mrf.mxu0
    %v1042 = vpop.f32.mrf.mxu0
    %1043 = vdwg.mxu0
    %v1044 = vmax.f32 %v1039, 0.0
    %v1045 = vpack.c.bf16 %v1044, %v1044
    %v1046 = vld [vmem:[#allocation2 + $0x4] ss:$0 sm:$0xff]
    %v1063 = vunpack.c.l.b16 %v94
    %v1064 = vunpack.c.l.b16 %v95
    %v1065 = vunpack.c.l.b16 %v96
    %v1066 = vunpack.c.l.b16 %v97
    %v1067 = vunpack.c.l.b16 %v98
    %v1068 = vunpack.c.l.b16 %v99
    %v1069 = vunpack.c.l.b16 %v100
    %v1070 = vunpack.c.l.b16 %v101
    %v1071 = vunpack.c.l.b16 %v102
    %v1072 = vunpack.c.l.b16 %v103
    %v1073 = vunpack.c.l.b16 %v104
    %v1074 = vunpack.c.l.b16 %v105
    %v1075 = vunpack.c.l.b16 %v106
    %v1076 = vunpack.c.l.b16 %v107
    %v1077 = vunpack.c.l.b16 %v108
    %v1078 = vunpack.c.l.b16 %v109
    %v1079 = vpack.c.b16 %v1064, %v1063
    %v1080 = vpack.c.b16 %v1066, %v1065
    %v1081 = vpack.c.b16 %v1068, %v1067
    %v1082 = vpack.c.b16 %v1070, %v1069
    %v1083 = vpack.c.b16 %v1072, %v1071
    %v1084 = vpack.c.b16 %v1074, %v1073
    %v1085 = vpack.c.b16 %v1076, %v1075
    %v1086 = vpack.c.b16 %v1078, %v1077
    %1095 = vmatprep.subr.bf16.mxu0 0
    %1096 = vmatpush1.bf16.msra.mxu0 %v1086
    %1097 = vmatprep.subr.bf16.mxu0 0
    %1098 = vmatpush1.bf16.msra.mxu0 %v1085
    %1099 = vmatprep.subr.bf16.mxu0 0
    %1100 = vmatpush1.bf16.msra.mxu0 %v1084
    %1101 = vmatprep.subr.bf16.mxu0 0
    %1102 = vmatpush1.bf16.msra.mxu0 %v1083
    %1103 = vmatprep.subr.bf16.mxu0 0
    %1104 = vmatpush1.bf16.msra.mxu0 %v1082
    %1105 = vmatprep.subr.bf16.mxu0 0
    %1106 = vmatpush1.bf16.msra.mxu0 %v1081
    %1107 = vmatprep.subr.bf16.mxu0 0
    %1108 = vmatpush1.bf16.msra.mxu0 %v1080
    %1109 = vmatprep.subr.bf16.mxu0 0
    %1110 = vmatpush1.bf16.msra.mxu0 %v1079
    %1111 = vmatprep.subr.bf16.mxu0 0
    %1112 = vmatpush2.bf16.msra.mxu0 0
    %1113 = vmatprep.subr.bf16.mxu0 0
    %1114 = vmatpush2.bf16.msra.mxu0 0
    %1115 = vmatprep.subr.bf16.mxu0 0
    %1116 = vmatpush2.bf16.msra.mxu0 0
    %1117 = vmatprep.subr.bf16.mxu0 0
    %1118 = vmatpush2.bf16.msra.mxu0 0
    %1119 = vmatprep.subr.bf16.mxu0 0
    %1120 = vmatpush2.bf16.msra.mxu0 0
    %1121 = vmatprep.subr.bf16.mxu0 0
    %1122 = vmatpush2.bf16.msra.mxu0 0
    %1123 = vmatprep.subr.bf16.mxu0 0
    %1124 = vmatpush2.bf16.msra.mxu0 0
    %1125 = vmatprep.subr.bf16.mxu0 0
    %1126 = vmatpush2.bf16.msra.mxu0 0
    %1127 = vmatprep.mubr.bf16.mxu0 0
    %1128 = vmatmul.mubr.bf16.gmra.mxu0 %v1045
    %v1129 = vpop.f32.mrf.mxu0
    %v1130 = vadd.f32 %v1046, %v1129
    %v1131 = vpop.f32.mrf.mxu0
    %v1132 = vpop.f32.mrf.mxu0
    %v1133 = vpop.f32.mrf.mxu0
    %1134 = vdwg.mxu0
    %v1135 = vmax.f32 %v1130, 0.0
    %v1136 = vpack.c.bf16 %v1135, %v1135
    %v1137 = vld [vmem:[#allocation2 + $0x5] ss:$0 sm:$0xff]
    %v1146 = vunpack.c.l.b16 %v110
    %v1147 = vunpack.c.l.b16 %v111
    %v1148 = vunpack.c.l.b16 %v112
    %v1149 = vunpack.c.l.b16 %v113
    %v1150 = vunpack.c.l.b16 %v114
    %v1151 = vunpack.c.l.b16 %v115
    %v1152 = vunpack.c.l.b16 %v116
    %v1153 = vunpack.c.l.b16 %v117
    %v1154 = vpack.c.b16 %v1147, %v1146
    %v1155 = vpack.c.b16 %v1149, %v1148
    %v1156 = vpack.c.b16 %v1151, %v1150
    %v1157 = vpack.c.b16 %v1153, %v1152
    %v1163 = vsel %vm298, %v1136, 0
    %1165 = vmatprep.subr.bf16.mxu0 0
    %1166 = vmatpush1.bf16.msra.mxu0 0
    %1167 = vmatprep.subr.bf16.mxu0 0
    %1168 = vmatpush1.bf16.msra.mxu0 0
    %1169 = vmatprep.subr.bf16.mxu0 0
    %1170 = vmatpush1.bf16.msra.mxu0 0
    %1171 = vmatprep.subr.bf16.mxu0 0
    %1172 = vmatpush1.bf16.msra.mxu0 0
    %1173 = vmatprep.subr.bf16.mxu0 0
    %1174 = vmatpush1.bf16.msra.mxu0 %v1157
    %1175 = vmatprep.subr.bf16.mxu0 0
    %1176 = vmatpush1.bf16.msra.mxu0 %v1156
    %1177 = vmatprep.subr.bf16.mxu0 0
    %1178 = vmatpush1.bf16.msra.mxu0 %v1155
    %1179 = vmatprep.subr.bf16.mxu0 0
    %1180 = vmatpush1.bf16.msra.mxu0 %v1154
    %1181 = vmatprep.subr.bf16.mxu0 0
    %1182 = vmatpush2.bf16.msra.mxu0 0
    %1183 = vmatprep.subr.bf16.mxu0 0
    %1184 = vmatpush2.bf16.msra.mxu0 0
    %1185 = vmatprep.subr.bf16.mxu0 0
    %1186 = vmatpush2.bf16.msra.mxu0 0
    %1187 = vmatprep.subr.bf16.mxu0 0
    %1188 = vmatpush2.bf16.msra.mxu0 0
    %1189 = vmatprep.subr.bf16.mxu0 0
    %1190 = vmatpush2.bf16.msra.mxu0 0
    %1191 = vmatprep.subr.bf16.mxu0 0
    %1192 = vmatpush2.bf16.msra.mxu0 0
    %1193 = vmatprep.subr.bf16.mxu0 0
    %1194 = vmatpush2.bf16.msra.mxu0 0
    %1195 = vmatprep.subr.bf16.mxu0 0
    %1196 = vmatpush2.bf16.msra.mxu0 0
    %1197 = vmatprep.mubr.bf16.mxu0 0
    %1198 = vmatmul.mubr.bf16.gmra.mxu0 %v1163
    %v1199 = vpop.f32.mrf.mxu0
    %v1200 = vadd.f32 %v1137, %v1199
    %v1201 = vpop.f32.mrf.mxu0
    %v1202 = vpop.f32.mrf.mxu0
    %v1203 = vpop.f32.mrf.mxu0
    %1204 = vdwg.mxu0
    %1205 = vst [vmem:[%s6] sm:$0x3] %v1200
    // Predicated region
    $region46: #{forward.1} parent=1 // pred_check
      _
    $region47: #{forward.1} parent=1 // pred_check_branch
      %1207 = sbr.rel (0) target = $region49
    $region48: #{forward.1} parent=1 // pred_region
      _
    $region49: #{forward.1} parent=1 // pred_fallthru
      _
    // Predicated region
    $region50: #{forward.1} parent=1 // pred_check
      _
    $region51: #{forward.1} parent=1 // pred_check_branch
      %1209 = sbr.rel (0) target = $region53
    $region52: #{forward.1} parent=1 // pred_region
      _
    $region53: #{forward.1} parent=1 // pred_fallthru
      _
    %1210 = vsyncpa [#allocation3], 1
    %1211 = vsyncpa [#allocation5], 1
    %1212 = vsyncpa [#allocation8], 1

</llo_original>
